<compile_context>
chip_gen: v7x
topology: tpu7x:2x2x1
jax: 0.10.0
libtpu: 0.0.40
codegen_flags: <defaults>
</compile_context>

<pallas_src>
import jax
import jax.numpy as jnp
from jax.experimental import pallas as pl
from jax.experimental.pallas import tpu as pltpu


def cross_attention_kernel(storage_ref, target_ref, w_vk_ref, b_vk_ref,
                           qw_ref, qb_ref, out_ref):
    block_b, C, HW = out_ref.shape

    # Shared (tiny) operands: load once per grid step, reuse across the batch block.
    w_vk = w_vk_ref[...]                 # (2C, C)  fused value/key weight
    b_vk = b_vk_ref[...]                 # (2C, 1)  fused value/key bias
    qw = qw_ref[0]                       # SMEM scalar: qury conv weight
    qb = qb_ref[0]                       # SMEM scalar: qury conv bias

    for b in range(block_b):             # static unroll over the batch block
        s = storage_ref[b]               # (C, HW)
        t = target_ref[b]                # (1, HW)

        # Fused 1x1 conv "cross_ant": one MXU matmul, then split into v / k.
        proj = jnp.dot(w_vk, s, preferred_element_type=jnp.float32) + b_vk
        s_v = proj[:C]                   # (C, HW)
        s_k = proj[C:]                   # (C, HW)

        # 1x1 conv "qury" on the single-channel target (scalar * map + scalar).
        t_q1 = qw * t + qb               # (1, HW) -- single query row

        # Single-row attention (all C query rows are identical broadcasts).
        # Transpose-free contraction over the HW axis: (1,HW) x (C,HW) -> (1,C).
        logits = jax.lax.dot_general(
            t_q1, s_k,
            dimension_numbers=(((1,), (1,)), ((), ())),
            preferred_element_type=jnp.float32)

        m = jnp.max(logits, axis=-1, keepdims=True)
        p = jnp.exp(logits - m)
        inv = pl.reciprocal(jnp.sum(p, axis=-1, keepdims=True), approx=True)
        kq = p * inv                     # (1, C) softmax row

        # Weighted sum of values: (1,C) @ (C,HW) -> (1,HW); broadcast at store.
        final1 = jnp.dot(kq, s_v, preferred_element_type=jnp.float32)
        out_ref[b] = jnp.broadcast_to(final1, (C, HW)).astype(out_ref.dtype)


def _pick_block_b(B, C, HW, itemsize):
    """Batches per grid step: big enough to amortize per-step pipeline overhead,
    but keep >=2 grid steps when possible (v7x megacore) and stay well under the
    per-generation scoped-VMEM limits (16 MiB on v5e)."""
    if B <= 2:
        return 1
    bytes_per_batch = C * HW * itemsize
    target_bytes = 1 << 20                       # ~1 MiB of storage per step
    want = max(1, target_bytes // max(bytes_per_batch, 1))
    cap = max(1, B // 2)                         # keep >=2 grid steps
    best = 1
    for d in range(1, B + 1):
        if B % d == 0 and d <= min(want, cap):
            best = d
    return best


def cross_attention(storage, target, params, *, block_b=None):
    """storage: (B, C, H, W) f32, target: (B, 1, H, W) f32."""
    B, C, H, W = storage.shape
    HW = H * W
    s_flat = storage.reshape(B, C, HW)
    t_flat = target.reshape(B, 1, HW)

    # Fused value/key projection parameters (full 2C rows -> one matmul in-kernel).
    w_vk = params["cross_w"].astype(jnp.float32)                    # (2C, C)
    b_vk = params["cross_b"].astype(jnp.float32).reshape(2 * C, 1)  # (2C, 1)
    # Scalar 1x1 conv params -> SMEM.
    qw = params["qury_w"].astype(jnp.float32).reshape(1)
    qb = params["qury_b"].astype(jnp.float32).reshape(1)

    if block_b is None:
        block_b = _pick_block_b(B, C, HW, storage.dtype.itemsize)
    assert B % block_b == 0, "block_b must divide batch size"
    grid = (B // block_b,)

    out = pl.pallas_call(
        cross_attention_kernel,
        out_shape=jax.ShapeDtypeStruct((B, C, HW), storage.dtype),
        grid_spec=pl.GridSpec(
            grid=grid,
            in_specs=[
                pl.BlockSpec((block_b, C, HW), lambda i: (i, 0, 0)),  # storage
                pl.BlockSpec((block_b, 1, HW), lambda i: (i, 0, 0)),  # target
                pl.BlockSpec((2 * C, C), lambda i: (0, 0)),           # fused w
                pl.BlockSpec((2 * C, 1), lambda i: (0, 0)),           # fused b
                pl.BlockSpec(memory_space=pltpu.MemorySpace.SMEM),    # qury w (scalar)
                pl.BlockSpec(memory_space=pltpu.MemorySpace.SMEM),    # qury b (scalar)
            ],
            out_specs=pl.BlockSpec((block_b, C, HW), lambda i: (i, 0, 0)),
        ),
        compiler_params=pltpu.CompilerParams(
            dimension_semantics=("parallel",),
        ),
    )(s_flat, t_flat, w_vk, b_vk, qw, qb)
    return out.reshape(B, C, H, W)


def cross_attention_reference(storage, target, params):
    """Pure-JAX reference mirroring the PyTorch forward."""
    B, C, H, W = storage.shape
    HW = H * W
    w, b = params["cross_w"], params["cross_b"]
    out = jnp.einsum("oc,bchw->bohw", w, storage) + b[None, :, None, None]
    s_v, s_k = out[:, :C], out[:, C:]
    t_q = params["qury_w"][0] * target + params["qury_b"][0]      # (B,1,H,W)
    t_q = jnp.broadcast_to(t_q, (B, C, H, W))
    s_kf = s_k.reshape(B, C, HW).transpose(0, 2, 1)               # (B, HW, C)
    t_qf = t_q.reshape(B, C, HW)
    kq = jax.nn.softmax(jnp.einsum("bch,bhd->bcd", t_qf, s_kf), axis=-1)
    s_vf = s_v.reshape(B, C, HW)
    final = jnp.einsum("bcd,bdh->bch", kq, s_vf)
    return final.reshape(B, C, H, W)


if __name__ == "__main__":
    B, dim, H, W = 2, 4, 16, 16
    key = jax.random.PRNGKey(0)
    k1, k2, k3, k4, k5, k6 = jax.random.split(key, 6)

    # Deterministic synthetic parameters (shapes from nn.Conv2d with k=1).
    params = {
        "cross_w": jax.random.normal(k1, (2 * dim, dim), jnp.float32) * 0.2,
        "cross_b": jax.random.normal(k2, (2 * dim,), jnp.float32) * 0.1,
        "qury_w": jax.random.normal(k3, (1,), jnp.float32) * 0.5 + 1.0,
        "qury_b": jax.random.normal(k4, (1,), jnp.float32) * 0.1,
    }

    storage = jax.random.normal(k5, (B, dim, H, W), jnp.float32)
    target = jax.random.normal(k6, (B, 1, H, W), jnp.float32)

    out = cross_attention(storage, target, params)
    out = jax.block_until_ready(out)

    ref = cross_attention_reference(storage, target, params)
    assert out.shape == (B, dim, H, W)
    # Tolerance accounts for the EUP approx-reciprocal in the softmax denominator.
    assert jnp.allclose(out, ref, atol=2e-3, rtol=2e-3), "mismatch vs reference"
    print("KERNEL_OK")
</pallas_src>

<mosaic_0001>
module attributes {stable_mosaic.version = 11 : i64} {
  func.func @cross_attention_kernel(%arg0: i32, %arg1: memref<1x4x256xf32, #tpu.memory_space<vmem>>, %arg2: memref<1x1x256xf32, #tpu.memory_space<vmem>>, %arg3: memref<8x4xf32, #tpu.memory_space<vmem>>, %arg4: memref<8x1xf32, #tpu.memory_space<vmem>>, %arg5: memref<1xf32, #tpu.memory_space<smem>>, %arg6: memref<1xf32, #tpu.memory_space<smem>>, %arg7: memref<1x4x256xf32, #tpu.memory_space<vmem>>) attributes {dimension_semantics = [#tpu.dimension_semantics<parallel>], iteration_bounds = array<i64: 2>, scalar_prefetch = 0 : i64, scratch_operands = 0 : i64, tpu.core_type = #tpu.core_type<tc>, window_params = [{transform_indices = @transform_0, window_bounds = array<i64: 1, 4, 256>}, {transform_indices = @transform_1, window_bounds = array<i64: 1, 1, 256>}, {pipeline_mode = #tpu.pipeline_mode<synchronous>, transform_indices = @transform_2, window_bounds = array<i64: 8, 4>}, {pipeline_mode = #tpu.pipeline_mode<synchronous>, transform_indices = @transform_3, window_bounds = array<i64: 8, 1>}, {transform_indices = @transform_4, window_bounds = array<i64: 1>}, {transform_indices = @transform_5, window_bounds = array<i64: 1>}, {transform_indices = @transform_6, window_bounds = array<i64: 1, 4, 256>}]} {
    %c0 = arith.constant 0 : index
    %c0_0 = arith.constant 0 : index
    %0 = vector.load %arg3[%c0, %c0_0] : memref<8x4xf32, #tpu.memory_space<vmem>>, vector<8x4xf32>
    %c0_1 = arith.constant 0 : index
    %c0_2 = arith.constant 0 : index
    %1 = vector.load %arg4[%c0_1, %c0_2] : memref<8x1xf32, #tpu.memory_space<vmem>>, vector<8x1xf32>
    %c0_3 = arith.constant 0 : index
    %2 = memref.load %arg5[%c0_3] : memref<1xf32, #tpu.memory_space<smem>>
    %c0_4 = arith.constant 0 : index
    %3 = memref.load %arg6[%c0_4] : memref<1xf32, #tpu.memory_space<smem>>
    %c0_5 = arith.constant 0 : index
    %c0_6 = arith.constant 0 : index
    %c0_7 = arith.constant 0 : index
    %4 = vector.load %arg1[%c0_5, %c0_6, %c0_7] : memref<1x4x256xf32, #tpu.memory_space<vmem>>, vector<1x4x256xf32>
    %5 = vector.shape_cast %4 : vector<1x4x256xf32> to vector<4x256xf32>
    %c0_8 = arith.constant 0 : index
    %c0_9 = arith.constant 0 : index
    %c0_10 = arith.constant 0 : index
    %6 = vector.load %arg2[%c0_8, %c0_9, %c0_10] : memref<1x1x256xf32, #tpu.memory_space<vmem>>, vector<1x1x256xf32>
    %7 = vector.shape_cast %6 : vector<1x1x256xf32> to vector<1x256xf32>
    %cst = arith.constant dense<0.000000e+00> : vector<8x256xf32>
    %8 = tpu.matmul %0, %5, %cst {dimension_numbers = #tpu.dot_dimension_numbers<[1], [0], [0], [1], [0, 0, 1, 1], [], []>} : vector<8x4xf32>, vector<4x256xf32>, vector<8x256xf32> -> vector<8x256xf32>
    %9 = vector.broadcast %1 : vector<8x1xf32> to vector<8x256xf32>
    %10 = arith.addf %8, %9 : vector<8x256xf32>
    %11 = vector.extract_strided_slice %10 {offsets = [0, 0], sizes = [4, 256], strides = [1, 1]} : vector<8x256xf32> to vector<4x256xf32>
    %12 = vector.extract_strided_slice %10 {offsets = [4, 0], sizes = [4, 256], strides = [1, 1]} : vector<8x256xf32> to vector<4x256xf32>
    %13 = vector.broadcast %2 : f32 to vector<1x256xf32>
    %14 = arith.mulf %13, %7 : vector<1x256xf32>
    %15 = vector.broadcast %3 : f32 to vector<1x256xf32>
    %16 = arith.addf %14, %15 : vector<1x256xf32>
    %cst_11 = arith.constant dense<0.000000e+00> : vector<1x4xf32>
    %17 = tpu.matmul %16, %12, %cst_11 {dimension_numbers = #tpu.dot_dimension_numbers<[1], [1], [0], [0], [0, 0, 1, 0], [], []>} : vector<1x256xf32>, vector<4x256xf32>, vector<1x4xf32> -> vector<1x4xf32>
    %cst_12 = arith.constant dense<0xFF800000> : vector<1xf32>
    %18 = vector.multi_reduction <maximumf>, %17, %cst_12 [1] : vector<1x4xf32> to vector<1xf32>
    %19 = vector.shape_cast %18 : vector<1xf32> to vector<1x1xf32>
    %20 = vector.broadcast %19 : vector<1x1xf32> to vector<1x4xf32>
    %21 = arith.subf %17, %20 : vector<1x4xf32>
    %22 = math.exp %21 : vector<1x4xf32>
    %cst_13 = arith.constant dense<0.000000e+00> : vector<1xf32>
    %23 = vector.multi_reduction <add>, %22, %cst_13 [1] : vector<1x4xf32> to vector<1xf32>
    %24 = vector.shape_cast %23 : vector<1xf32> to vector<1x1xf32>
    %25 = tpu.reciprocal %24 {approx = true} : vector<1x1xf32> -> vector<1x1xf32>
    %26 = vector.broadcast %25 : vector<1x1xf32> to vector<1x4xf32>
    %27 = arith.mulf %22, %26 : vector<1x4xf32>
    %cst_14 = arith.constant dense<0.000000e+00> : vector<1x256xf32>
    %28 = tpu.matmul %27, %11, %cst_14 {dimension_numbers = #tpu.dot_dimension_numbers<[1], [0], [0], [1], [0, 0, 1, 1], [], []>} : vector<1x4xf32>, vector<4x256xf32>, vector<1x256xf32> -> vector<1x256xf32>
    %29 = vector.shape_cast %28 : vector<1x256xf32> to vector<1x256xf32>
    %30 = vector.broadcast %29 : vector<1x256xf32> to vector<4x256xf32>
    %c0_15 = arith.constant 0 : index
    %c0_16 = arith.constant 0 : index
    %c0_17 = arith.constant 0 : index
    %31 = vector.load %arg7[%c0_15, %c0_16, %c0_17] : memref<1x4x256xf32, #tpu.memory_space<vmem>>, vector<1x4x256xf32>
    %32 = vector.shape_cast %31 : vector<1x4x256xf32> to vector<4x256xf32>
    %33 = vector.shape_cast %30 : vector<4x256xf32> to vector<1x4x256xf32>
    tpu.vector_store %arg7[%c0_15, %c0_16, %c0_17], %33 {strides = array<i32>} : memref<1x4x256xf32, #tpu.memory_space<vmem>>, vector<1x4x256xf32>,
    return
  }
  func.func @transform_0(%arg0: i32) -> (i32, i32, i32) {
    %c0_i32 = arith.constant 0 : i32
    %c0_i32_0 = arith.constant 0 : i32
    %c0_i32_1 = arith.constant 0 : i32
    return %arg0, %c0_i32, %c0_i32_0 : i32, i32, i32
  }
  func.func @transform_1(%arg0: i32) -> (i32, i32, i32) {
    %c0_i32 = arith.constant 0 : i32
    %c0_i32_0 = arith.constant 0 : i32
    %c0_i32_1 = arith.constant 0 : i32
    return %arg0, %c0_i32, %c0_i32_0 : i32, i32, i32
  }
  func.func @transform_2(%arg0: i32) -> (i32, i32) {
    %c0_i32 = arith.constant 0 : i32
    %c0_i32_0 = arith.constant 0 : i32
    %c0_i32_1 = arith.constant 0 : i32
    return %c0_i32, %c0_i32_0 : i32, i32
  }
  func.func @transform_3(%arg0: i32) -> (i32, i32) {
    %c0_i32 = arith.constant 0 : i32
    %c0_i32_0 = arith.constant 0 : i32
    %c0_i32_1 = arith.constant 0 : i32
    return %c0_i32, %c0_i32_0 : i32, i32
  }
  func.func @transform_4(%arg0: i32) -> i32 {
    %c0_i32 = arith.constant 0 : i32
    %c0_i32_0 = arith.constant 0 : i32
    return %c0_i32 : i32
  }
  func.func @transform_5(%arg0: i32) -> i32 {
    %c0_i32 = arith.constant 0 : i32
    %c0_i32_0 = arith.constant 0 : i32
    return %c0_i32 : i32
  }
  func.func @transform_6(%arg0: i32) -> (i32, i32, i32) {
    %c0_i32 = arith.constant 0 : i32
    %c0_i32_0 = arith.constant 0 : i32
    %c0_i32_1 = arith.constant 0 : i32
    return %arg0, %c0_i32, %c0_i32_0 : i32, i32, i32
  }
}

</mosaic_0001>

<llo_original>
// kernel: tpu_custom_call.1
$region0: #{tpu_custom_call.1}
  #allocation0 [shape = 'u32[]', space=smem, size = 0x4, offset = 0x4, fixed_abs, tag = 'smem constant byte address 0x4 - core index']
  #allocation1 [shape = 'u32[144,128]{1,0:T(1,128)}', space=vmem, size = 0x12000, scoped, tag = 'internal scratch']
  #allocation2 [shape = 'f32[1]{0:T(128)S(6)}', space=smem, size = 0x200, scoped, tag = 'scoped memory for tpu_custom_call.1']
  #allocation3 [shape = 'f32[1]{0:T(128)S(6)}', space=smem, size = 0x200, scoped, tag = 'scoped memory for tpu_custom_call.1']
  %s0 = inlined_call_operand.vmem [shape: f32[2,4,256], index: 0, kind: input, shape index: {}]
  %s1 = inlined_call_operand.vmem [shape: f32[2,1,256], index: 1, kind: input, shape index: {}]
  %s2 = inlined_call_operand.vmem [shape: f32[8,4], index: 2, kind: input, shape index: {}]
  %s3 = inlined_call_operand.vmem [shape: f32[8,1], index: 3, kind: input, shape index: {}]
  %s4 = inlined_call_operand.<no memory space> [shape: f32[1], index: 4, kind: input, shape index: {}]
  %s5 = inlined_call_operand.<no memory space> [shape: f32[1], index: 5, kind: input, shape index: {}]
  %s6 = inlined_call_operand.hbm [shape: f32[2,4,256], index: 6, kind: output, shape index: {}]
  %s7 = sld [smem:[#allocation0]]
  $region57: #{tpu_custom_call.1} parent=0
    _
  %s9 = ssub.s32 1, %s7
  %s10 = scalar_select 0, %s9, %s7
  %11 = sst [smem:[#allocation2]] %s4
  %12 = sst [smem:[#allocation3]] %s5
  $region1: #{tpu_custom_call.1} parent=0
    #allocation4 [shape = 'u8[8192]{0}', space=vmem, size = 0x2000, scoped, tag = 'output window, operand 0']
    #allocation5 [shape = 's32[2]{0}', space=sflag, size = 0x8, scoped, tag = 'scoped memory for tpu_custom_call.1']
    %13 = vsyncpa [#allocation5], 0
    %s14 = scalar_lea.sflag [#allocation5], 1
    %15 = vsyncpa %s14, 0
    loop: start=0, step=1, limit=4
    $region2: #{tpu_custom_call.1} parent=1 // loop_pre_header
      _
    $region3: #{tpu_custom_call.1} parent=1 // loop_header
      %s17 = sphi 0, %s21
      %p18 = scmp.ge.s32.totalorder %s17, 4
      %s27 = sphi 0, %s29
      %s30 = sphi 0, %s27
      %s31 = sphi 0, %s30
      %s47 = sphi 0, %s31
      %s53 = sphi 0, %s55
      %s56 = sphi 0, %s53
      %s57 = sphi 0, %s56
      %s73 = sphi 0, %s57
      %s77 = sphi 0, %s77
      %s79 = sphi 0, %s77
      %s80 = sphi 0, %s79
      %s94 = sphi 0, %s80
      %s98 = sphi 0, %s98
      %s100 = sphi 0, %s98
      %s101 = sphi 0, %s100
      %s115 = sphi 0, %s101
      %s119 = sphi 0, %s119
      %s121 = sphi 0, %s119
      %s122 = sphi 0, %s121
      %s136 = sphi 0, %s122
      %s140 = sphi 0, %s140
      %s142 = sphi 0, %s140
      %s143 = sphi 0, %s142
      %s157 = sphi 0, %s143
      %s163 = sphi 0, %s165
      %s166 = sphi 0, %s163
      %s167 = sphi 0, %s166
      %s183 = sphi 0, %s167
    $region4: #{tpu_custom_call.1} parent=1 // loop_header_branch
      %20 = sbr.rel (%p18) target = $region8
    $region5: #{tpu_custom_call.1} parent=1 // loop_body
      %s22 = ssub.s32 %s17, 1
      %s23 = ssub.s32 %s17, 2
      %s24 = sadd.s32 %s17, 1
      %s25 = ssub.s32 %s17, %s24
      %p26 = scmp.eq.s32.totalorder %s25, 0
      %s28 = sadd.s32 %s27, 1
      %s29 = scalar_select %p26, %s27, %s28
      %p32 = pneg %p26
      %p33 = scmp.eq.s32.totalorder %s17, 1
      %p34 = por %p32, %p33
      %p35 = scmp.ne.s32.totalorder %s27, %s30
      %p36 = scmp.eq.s32.totalorder %s17, 0
      %p37 = por %p35, %p36
      %p38 = scmp.ne.s32.totalorder %s27, %s30
      %p39 = scmp.eq.s32.totalorder %s22, 1
      %p40 = por %p38, %p39
      %p41 = scmp.ne.s32.totalorder %s30, %s31
      %p42 = scmp.eq.s32.totalorder %s22, 0
      %p43 = por %p41, %p42
      %p44 = scmp.ne.s32.totalorder %s30, %s31
      %p45 = scmp.eq.s32.totalorder %s23, 1
      %p46 = por %p44, %p45
      %p48 = scmp.ne.s32.totalorder %s31, %s47
      %p49 = scmp.eq.s32.totalorder %s23, 0
      %p50 = por %p48, %p49
      %s51 = ssub.s32 %s17, %s24
      %p52 = scmp.eq.s32.totalorder %s51, 0
      %s54 = sadd.s32 %s53, 1
      %s55 = scalar_select %p52, %s53, %s54
      %p58 = pneg %p52
      %p59 = scmp.eq.s32.totalorder %s17, 1
      %p60 = por %p58, %p59
      %p61 = scmp.ne.s32.totalorder %s53, %s56
      %p62 = scmp.eq.s32.totalorder %s17, 0
      %p63 = por %p61, %p62
      %p64 = scmp.ne.s32.totalorder %s53, %s56
      %p65 = scmp.eq.s32.totalorder %s22, 1
      %p66 = por %p64, %p65
      %p67 = scmp.ne.s32.totalorder %s56, %s57
      %p68 = scmp.eq.s32.totalorder %s22, 0
      %p69 = por %p67, %p68
      %p70 = scmp.ne.s32.totalorder %s56, %s57
      %p71 = scmp.eq.s32.totalorder %s23, 1
      %p72 = por %p70, %p71
      %p74 = scmp.ne.s32.totalorder %s57, %s73
      %p75 = scmp.eq.s32.totalorder %s23, 0
      %p76 = por %p74, %p75
      %s78 = sadd.s32 %s77, 1
      %p81 = scmp.eq.s32.totalorder %s17, 1
      %p82 = scmp.ne.s32.totalorder %s77, %s79
      %p83 = scmp.eq.s32.totalorder %s17, 0
      %p84 = por %p82, %p83
      %p85 = scmp.ne.s32.totalorder %s77, %s79
      %p86 = scmp.eq.s32.totalorder %s22, 1
      %p87 = por %p85, %p86
      %p88 = scmp.ne.s32.totalorder %s79, %s80
      %p89 = scmp.eq.s32.totalorder %s22, 0
      %p90 = por %p88, %p89
      %p91 = scmp.ne.s32.totalorder %s79, %s80
      %p92 = scmp.eq.s32.totalorder %s23, 1
      %p93 = por %p91, %p92
      %p95 = scmp.ne.s32.totalorder %s80, %s94
      %p96 = scmp.eq.s32.totalorder %s23, 0
      %p97 = por %p95, %p96
      %s99 = sadd.s32 %s98, 1
      %p102 = scmp.eq.s32.totalorder %s17, 1
      %p103 = scmp.ne.s32.totalorder %s98, %s100
      %p104 = scmp.eq.s32.totalorder %s17, 0
      %p105 = por %p103, %p104
      %p106 = scmp.ne.s32.totalorder %s98, %s100
      %p107 = scmp.eq.s32.totalorder %s22, 1
      %p108 = por %p106, %p107
      %p109 = scmp.ne.s32.totalorder %s100, %s101
      %p110 = scmp.eq.s32.totalorder %s22, 0
      %p111 = por %p109, %p110
      %p112 = scmp.ne.s32.totalorder %s100, %s101
      %p113 = scmp.eq.s32.totalorder %s23, 1
      %p114 = por %p112, %p113
      %p116 = scmp.ne.s32.totalorder %s101, %s115
      %p117 = scmp.eq.s32.totalorder %s23, 0
      %p118 = por %p116, %p117
      %s120 = sadd.s32 %s119, 1
      %p123 = scmp.eq.s32.totalorder %s17, 1
      %p124 = scmp.ne.s32.totalorder %s119, %s121
      %p125 = scmp.eq.s32.totalorder %s17, 0
      %p126 = por %p124, %p125
      %p127 = scmp.ne.s32.totalorder %s119, %s121
      %p128 = scmp.eq.s32.totalorder %s22, 1
      %p129 = por %p127, %p128
      %p130 = scmp.ne.s32.totalorder %s121, %s122
      %p131 = scmp.eq.s32.totalorder %s22, 0
      %p132 = por %p130, %p131
      %p133 = scmp.ne.s32.totalorder %s121, %s122
      %p134 = scmp.eq.s32.totalorder %s23, 1
      %p135 = por %p133, %p134
      %p137 = scmp.ne.s32.totalorder %s122, %s136
      %p138 = scmp.eq.s32.totalorder %s23, 0
      %p139 = por %p137, %p138
      %s141 = sadd.s32 %s140, 1
      %p144 = scmp.eq.s32.totalorder %s17, 1
      %p145 = scmp.ne.s32.totalorder %s140, %s142
      %p146 = scmp.eq.s32.totalorder %s17, 0
      %p147 = por %p145, %p146
      %p148 = scmp.ne.s32.totalorder %s140, %s142
      %p149 = scmp.eq.s32.totalorder %s22, 1
      %p150 = por %p148, %p149
      %p151 = scmp.ne.s32.totalorder %s142, %s143
      %p152 = scmp.eq.s32.totalorder %s22, 0
      %p153 = por %p151, %p152
      %p154 = scmp.ne.s32.totalorder %s142, %s143
      %p155 = scmp.eq.s32.totalorder %s23, 1
      %p156 = por %p154, %p155
      %p158 = scmp.ne.s32.totalorder %s143, %s157
      %p159 = scmp.eq.s32.totalorder %s23, 0
      %p160 = por %p158, %p159
      %s161 = ssub.s32 %s17, %s24
      %p162 = scmp.eq.s32.totalorder %s161, 0
      %s164 = sadd.s32 %s163, 1
      %s165 = scalar_select %p162, %s163, %s164
      %p168 = pneg %p162
      %p169 = scmp.eq.s32.totalorder %s17, 1
      %p170 = por %p168, %p169
      %p171 = scmp.ne.s32.totalorder %s163, %s166
      %p172 = scmp.eq.s32.totalorder %s17, 0
      %p173 = por %p171, %p172
      %p174 = scmp.ne.s32.totalorder %s163, %s166
      %p175 = scmp.eq.s32.totalorder %s22, 1
      %p176 = por %p174, %p175
      %p177 = scmp.ne.s32.totalorder %s166, %s167
      %p178 = scmp.eq.s32.totalorder %s22, 0
      %p179 = por %p177, %p178
      %p180 = scmp.ne.s32.totalorder %s166, %s167
      %p181 = scmp.eq.s32.totalorder %s23, 1
      %p182 = por %p180, %p181
      %p184 = scmp.ne.s32.totalorder %s167, %s183
      %p185 = scmp.eq.s32.totalorder %s23, 0
      %p186 = por %p184, %p185
      %p187 = scmp.le.s32.totalorder 1, %s17
      %p188 = scmp.lt.s32.totalorder %s17, 3
      %p189 = pnand %p187, %p188
      %p190 = pneg %p189
      // Predicated region
      $region9: #{tpu_custom_call.1} parent=5 // pred_check
        _
      $region10: #{tpu_custom_call.1} parent=5 // pred_check_branch
        %192 = sbr.rel (%p189) target = $region12
      $region11: #{tpu_custom_call.1} parent=5 // pred_region
        %s193 = ssub.s32 %s17, 1
        // Predicated region
        $region13: #{tpu_custom_call.1} parent=11 // pred_check
          %p194 = pneg %p90
        $region14: #{tpu_custom_call.1} parent=11 // pred_check_branch
          %196 = sbr.rel (%p194) target = $region16
        $region15: #{tpu_custom_call.1} parent=11 // pred_region
          _
        $region16: #{tpu_custom_call.1} parent=11 // pred_fallthru
          _
        // Predicated region
        $region17: #{tpu_custom_call.1} parent=11 // pred_check
          %p197 = pneg %p111
        $region18: #{tpu_custom_call.1} parent=11 // pred_check_branch
          %199 = sbr.rel (%p197) target = $region20
        $region19: #{tpu_custom_call.1} parent=11 // pred_region
          _
        $region20: #{tpu_custom_call.1} parent=11 // pred_fallthru
          _
        // Predicated region
        $region21: #{tpu_custom_call.1} parent=11 // pred_check
          %p200 = pneg %p132
        $region22: #{tpu_custom_call.1} parent=11 // pred_check_branch
          %202 = sbr.rel (%p200) target = $region24
        $region23: #{tpu_custom_call.1} parent=11 // pred_region
          _
        $region24: #{tpu_custom_call.1} parent=11 // pred_fallthru
          _
        // Predicated region
        $region25: #{tpu_custom_call.1} parent=11 // pred_check
          %p203 = pneg %p153
        $region26: #{tpu_custom_call.1} parent=11 // pred_check_branch
          %205 = sbr.rel (%p203) target = $region28
        $region27: #{tpu_custom_call.1} parent=11 // pred_region
          _
        $region28: #{tpu_custom_call.1} parent=11 // pred_fallthru
          _
      $region12: #{tpu_custom_call.1} parent=5 // pred_fallthru
        _
      %p206 = scmp.lt.s32.totalorder %s17, 2
      // Predicated region
      $region29: #{tpu_custom_call.1} parent=5 // pred_check
        %p207 = pneg %p206
      $region30: #{tpu_custom_call.1} parent=5 // pred_check_branch
        %209 = sbr.rel (%p207) target = $region32
      $region31: #{tpu_custom_call.1} parent=5 // pred_region
        // Predicated region
        $region33: #{tpu_custom_call.1} parent=31 // pred_check
          %p210 = pneg %p37
        $region34: #{tpu_custom_call.1} parent=31 // pred_check_branch
          %212 = sbr.rel (%p210) target = $region36
        $region35: #{tpu_custom_call.1} parent=31 // pred_region
          %p213 = scmp.lt.s32.totalorder %s17, 1
          %s214 = scalar_select %p213, %s17, 1
          %s215 = smul.addr %s214, 2
          %s216 = smul.addr %s215, 4
          %s217 = scalar_lea.vmem %s0, %s216
        $region36: #{tpu_custom_call.1} parent=31 // pred_fallthru
          _
        // Predicated region
        $region37: #{tpu_custom_call.1} parent=31 // pred_check
          %p218 = pneg %p63
        $region38: #{tpu_custom_call.1} parent=31 // pred_check_branch
          %220 = sbr.rel (%p218) target = $region40
        $region39: #{tpu_custom_call.1} parent=31 // pred_region
          %p221 = scmp.lt.s32.totalorder %s17, 1
          %s222 = scalar_select %p221, %s17, 1
          %s223 = smul.addr %s222, 2
          %s224 = scalar_lea.vmem %s1, %s223
        $region40: #{tpu_custom_call.1} parent=31 // pred_fallthru
          _
      $region32: #{tpu_custom_call.1} parent=5 // pred_fallthru
        _
      %p225 = scmp.le.s32.totalorder 1, %s17
      %p226 = scmp.lt.s32.totalorder %s17, 3
      %p227 = pnand %p225, %p226
      %p228 = pneg %p227
      // Predicated region
      $region41: #{tpu_custom_call.1} parent=5 // pred_check
        _
      $region42: #{tpu_custom_call.1} parent=5 // pred_check_branch
        %230 = sbr.rel (%p227) target = $region44
      $region43: #{tpu_custom_call.1} parent=5 // pred_region
        %s231 = ssub.s32 %s17, 1
        %p232 = scmp.lt.s32.totalorder %s22, 1
        %s233 = scalar_select %p232, %s22, 1
        %s234 = smul.addr %s233, 2
        %s235 = smul.addr %s234, 4
        %s236 = scalar_lea.vmem %s0, %s235
        %p237 = pneg %p43
        %p238 = pneg %p40
        %p239 = scmp.lt.s32.totalorder %s22, 1
        %s240 = scalar_select %p239, %s22, 1
        %s241 = smul.addr %s240, 2
        %s242 = scalar_lea.vmem %s1, %s241
        %p243 = pneg %p69
        %p244 = pneg %p66
        %p245 = pneg %p90
        %p246 = pneg %p87
        %p247 = pneg %p111
        %p248 = pneg %p108
        %p249 = pneg %p132
        %p250 = pneg %p129
        %p251 = pneg %p153
        %p252 = pneg %p150
        %p253 = pneg %p179
        %p254 = pneg %p176
        %s255 = sand.u32 %s166, 1
        %s256 = scalar_lea.sflag [#allocation5], %s255
        %s257 = sand.u32 %s166, 1
        %s258 = smul.addr %s257, 8
        %s259 = scalar_lea.vmem [#allocation4], %s258
        %p260 = scmp.lt.s32.totalorder %s22, 1
        %s261 = scalar_select %p260, %s22, 1
        %s262 = smul.addr %s261, 2
        %s263 = smul.addr %s262, 4
        %s264 = scalar_lea.vmem %s0, %s263
        %p265 = scmp.lt.s32.totalorder %s22, 1
        %s266 = scalar_select %p265, %s22, 1
        %s267 = smul.addr %s266, 2
        %s268 = scalar_lea.vmem %s1, %s267
        %v269 = vld [vmem:[%s2] sm:$0xff]
        %v270 = vld [vmem:[%s3] sm:$0xff]
        %s271 = sld [smem:[#allocation2]]
        %s272 = sld [smem:[#allocation3]]
        %v273 = vld [vmem:[%s264] sm:$0xff]
        %v274 = vld [vmem:[%s268] sm:$0x3]
        %276 = vset.pattern.permute.xlu0 0
        %277 = vperm.xlu0 %276, %v270
        %v278 = vpop.permute.xlu0 %277
        %v281 = vcombine.high %v273, %v273
        %vm282 = vcmask 31744
        %v284 = vsel %vm282, %v269, 0
        %vm286 = vcmask 1043456
        %v287 = vsel %vm286, %v273, 0
        %v289 = vsel %vm286, %v281, 0
        %291 = vmatprep.subr.mxu0 %v289
        %292 = vmatpush1.msra.mxu0 %v287
        %293 = vmatprep.subr.mxu0 0.0
        %294 = vmatpush1.msra.mxu0 0.0
        %295 = vmatprep.subr.mxu0 0.0
        %296 = vmatpush1.msra.mxu0 0.0
        %297 = vmatprep.subr.mxu0 0.0
        %298 = vmatpush1.msra.mxu0 0.0
        %299 = vmatprep.subr.mxu0 0.0
        %300 = vmatpush1.msra.mxu0 0.0
        %301 = vmatprep.subr.mxu0 0.0
        %302 = vmatpush1.msra.mxu0 0.0
        %303 = vmatprep.subr.mxu0 0.0
        %304 = vmatpush1.msra.mxu0 0.0
        %305 = vmatprep.subr.mxu0 0.0
        %306 = vmatpush1.msra.mxu0 0.0
        %307 = vmatprep.subr.mxu0 0.0
        %308 = vmatpush1.msra.mxu0 0.0
        %309 = vmatprep.subr.mxu0 0.0
        %310 = vmatpush1.msra.mxu0 0.0
        %311 = vmatprep.subr.mxu0 0.0
        %312 = vmatpush1.msra.mxu0 0.0
        %313 = vmatprep.subr.mxu0 0.0
        %314 = vmatpush1.msra.mxu0 0.0
        %315 = vmatprep.subr.mxu0 0.0
        %316 = vmatpush1.msra.mxu0 0.0
        %317 = vmatprep.subr.mxu0 0.0
        %318 = vmatpush1.msra.mxu0 0.0
        %319 = vmatprep.subr.mxu0 0.0
        %320 = vmatpush1.msra.mxu0 0.0
        %321 = vmatprep.subr.mxu0 0.0
        %322 = vmatpush1.msra.mxu0 0.0
        %323 = vmatprep.subr.mxu0 0.0
        %324 = vmatpush1.msra.mxu0 0.0
        %325 = vmatprep.subr.mxu0 0.0
        %326 = vmatpush1.msra.mxu0 0.0
        %327 = vmatprep.subr.mxu0 0.0
        %328 = vmatpush1.msra.mxu0 0.0
        %329 = vmatprep.subr.mxu0 0.0
        %330 = vmatpush1.msra.mxu0 0.0
        %331 = vmatprep.subr.mxu0 0.0
        %332 = vmatpush1.msra.mxu0 0.0
        %333 = vmatprep.subr.mxu0 0.0
        %334 = vmatpush1.msra.mxu0 0.0
        %335 = vmatprep.subr.mxu0 0.0
        %336 = vmatpush1.msra.mxu0 0.0
        %337 = vmatprep.subr.mxu0 0.0
        %338 = vmatpush1.msra.mxu0 0.0
        %339 = vmatprep.subr.mxu0 0.0
        %340 = vmatpush1.msra.mxu0 0.0
        %341 = vmatprep.subr.mxu0 0.0
        %342 = vmatpush1.msra.mxu0 0.0
        %343 = vmatprep.subr.mxu0 0.0
        %344 = vmatpush1.msra.mxu0 0.0
        %345 = vmatprep.subr.mxu0 0.0
        %346 = vmatpush1.msra.mxu0 0.0
        %347 = vmatprep.subr.mxu0 0.0
        %348 = vmatpush1.msra.mxu0 0.0
        %349 = vmatprep.subr.mxu0 0.0
        %350 = vmatpush1.msra.mxu0 0.0
        %351 = vmatprep.subr.mxu0 0.0
        %352 = vmatpush1.msra.mxu0 0.0
        %353 = vmatprep.subr.mxu0 0.0
        %354 = vmatpush1.msra.mxu0 0.0
        %355 = vmatprep.mubr.f32.mxu0 0.0
        %356 = vmatmul.mubr.f32.gmra.mrb[0].mxu0 %v284
        %v357 = vpop.f32.mrb[0].mxu0
        %v358 = vadd.f32 %v278, %v357
        %v359 = vpop.f32.mrb[0].mxu0
        %v360 = vadd.f32 %v278, %v359
        %361 = vdwg.mxu0
        %v362 = vstv %s271
        %v363 = vmul.f32 %v362, %v274
        %v364 = vstv %s272
        %v365 = vadd.f32 %v363, %v364
        %v367 = vlaneseq
        %v368 = vshrl.u32 %v367, 7
        %v369 = vsub.s32 0, %v368
        %v370 = vrot.slane %v365, %v369
        %v371 = vlaneseq
        %v372 = vshrl.u32 %v371, 7
        %v373 = vsub.s32 1, %v372
        %v374 = vrot.slane %v365, %v373
        %v379 = vrot.slane %v358, 4
        %v380 = vrot.slane %v360, 4
        %383 = vmatprep.subr.mxu0 %v380
        %384 = vmatpush1.xpose.msra.mxu0 %v379
        %385 = vmatprep.subr.mxu0 0.0
        %386 = vmatpush1.xpose.msra.mxu0 0.0
        %387 = vmatprep.subr.mxu0 0.0
        %388 = vmatpush1.xpose.msra.mxu0 0.0
        %389 = vmatprep.subr.mxu0 0.0
        %390 = vmatpush1.xpose.msra.mxu0 0.0
        %391 = vmatprep.subr.mxu0 0.0
        %392 = vmatpush1.xpose.msra.mxu0 0.0
        %393 = vmatprep.subr.mxu0 0.0
        %394 = vmatpush1.xpose.msra.mxu0 0.0
        %395 = vmatprep.subr.mxu0 0.0
        %396 = vmatpush1.xpose.msra.mxu0 0.0
        %397 = vmatprep.subr.mxu0 0.0
        %398 = vmatpush1.xpose.msra.mxu0 0.0
        %399 = vmatprep.subr.mxu0 0.0
        %400 = vmatpush1.xpose.msra.mxu0 0.0
        %401 = vmatprep.subr.mxu0 0.0
        %402 = vmatpush1.xpose.msra.mxu0 0.0
        %403 = vmatprep.subr.mxu0 0.0
        %404 = vmatpush1.xpose.msra.mxu0 0.0
        %405 = vmatprep.subr.mxu0 0.0
        %406 = vmatpush1.xpose.msra.mxu0 0.0
        %407 = vmatprep.subr.mxu0 0.0
        %408 = vmatpush1.xpose.msra.mxu0 0.0
        %409 = vmatprep.subr.mxu0 0.0
        %410 = vmatpush1.xpose.msra.mxu0 0.0
        %411 = vmatprep.subr.mxu0 0.0
        %412 = vmatpush1.xpose.msra.mxu0 0.0
        %413 = vmatprep.subr.mxu0 0.0
        %414 = vmatpush1.xpose.msra.mxu0 0.0
        %415 = vmatprep.subr.mxu0 0.0
        %416 = vmatpush1.xpose.msra.mxu0 0.0
        %417 = vmatprep.subr.mxu0 0.0
        %418 = vmatpush1.xpose.msra.mxu0 0.0
        %419 = vmatprep.subr.mxu0 0.0
        %420 = vmatpush1.xpose.msra.mxu0 0.0
        %421 = vmatprep.subr.mxu0 0.0
        %422 = vmatpush1.xpose.msra.mxu0 0.0
        %423 = vmatprep.subr.mxu0 0.0
        %424 = vmatpush1.xpose.msra.mxu0 0.0
        %425 = vmatprep.subr.mxu0 0.0
        %426 = vmatpush1.xpose.msra.mxu0 0.0
        %427 = vmatprep.subr.mxu0 0.0
        %428 = vmatpush1.xpose.msra.mxu0 0.0
        %429 = vmatprep.subr.mxu0 0.0
        %430 = vmatpush1.xpose.msra.mxu0 0.0
        %431 = vmatprep.subr.mxu0 0.0
        %432 = vmatpush1.xpose.msra.mxu0 0.0
        %433 = vmatprep.subr.mxu0 0.0
        %434 = vmatpush1.xpose.msra.mxu0 0.0
        %435 = vmatprep.subr.mxu0 0.0
        %436 = vmatpush1.xpose.msra.mxu0 0.0
        %437 = vmatprep.subr.mxu0 0.0
        %438 = vmatpush1.xpose.msra.mxu0 0.0
        %439 = vmatprep.subr.mxu0 0.0
        %440 = vmatpush1.xpose.msra.mxu0 0.0
        %441 = vmatprep.subr.mxu0 0.0
        %442 = vmatpush1.xpose.msra.mxu0 0.0
        %443 = vmatprep.subr.mxu0 0.0
        %444 = vmatpush1.xpose.msra.mxu0 0.0
        %445 = vmatprep.subr.mxu0 0.0
        %446 = vmatpush1.xpose.msra.mxu0 0.0
        %447 = vmatprep.mubr.f32.mxu0 %v374
        %448 = vmatmul.mubr.f32.gmra.mrb[0].mxu0 %v370
        %v449 = vpop.f32.mrb[0].mxu0
        %v450 = vadd.f32 0.0, %v449
        %v451 = vpop.f32.mrb[0].mxu0
        %452 = vdwg.mxu0
        %vm453 = vcmask 24576
        %v454 = vsel %vm453, %v450, -inf
        %455 = vmax.xlane.f32.xlu0 %v454
        %v456 = vpop.xlane.xlu0 %455
        %v457 = vsub.f32 %v450, %v456
        %v458 = vmul.f32 %v457, 1.442695
        %v459 = vpow.pop %v458
        %v460 = vsel %vm453, %v459, 0.0
        %461 = vadd.xlane.f32.xlu0 %v460
        %v462 = vpop.xlane.xlu0 %461
        %v463 = vrcp.pop %v462
        %v464 = vmul.f32 %v459, %v463
        %v466 = vsel %vm282, %v464, 0
        %v468 = vsel %vm286, %v358, 0
        %v470 = vsel %vm286, %v360, 0
        %472 = vmatprep.subr.mxu0 %v470
        %473 = vmatpush1.msra.mxu0 %v468
        %474 = vmatprep.subr.mxu0 0.0
        %475 = vmatpush1.msra.mxu0 0.0
        %476 = vmatprep.subr.mxu0 0.0
        %477 = vmatpush1.msra.mxu0 0.0
        %478 = vmatprep.subr.mxu0 0.0
        %479 = vmatpush1.msra.mxu0 0.0
        %480 = vmatprep.subr.mxu0 0.0
        %481 = vmatpush1.msra.mxu0 0.0
        %482 = vmatprep.subr.mxu0 0.0
        %483 = vmatpush1.msra.mxu0 0.0
        %484 = vmatprep.subr.mxu0 0.0
        %485 = vmatpush1.msra.mxu0 0.0
        %486 = vmatprep.subr.mxu0 0.0
        %487 = vmatpush1.msra.mxu0 0.0
        %488 = vmatprep.subr.mxu0 0.0
        %489 = vmatpush1.msra.mxu0 0.0
        %490 = vmatprep.subr.mxu0 0.0
        %491 = vmatpush1.msra.mxu0 0.0
        %492 = vmatprep.subr.mxu0 0.0
        %493 = vmatpush1.msra.mxu0 0.0
        %494 = vmatprep.subr.mxu0 0.0
        %495 = vmatpush1.msra.mxu0 0.0
        %496 = vmatprep.subr.mxu0 0.0
        %497 = vmatpush1.msra.mxu0 0.0
        %498 = vmatprep.subr.mxu0 0.0
        %499 = vmatpush1.msra.mxu0 0.0
        %500 = vmatprep.subr.mxu0 0.0
        %501 = vmatpush1.msra.mxu0 0.0
        %502 = vmatprep.subr.mxu0 0.0
        %503 = vmatpush1.msra.mxu0 0.0
        %504 = vmatprep.subr.mxu0 0.0
        %505 = vmatpush1.msra.mxu0 0.0
        %506 = vmatprep.subr.mxu0 0.0
        %507 = vmatpush1.msra.mxu0 0.0
        %508 = vmatprep.subr.mxu0 0.0
        %509 = vmatpush1.msra.mxu0 0.0
        %510 = vmatprep.subr.mxu0 0.0
        %511 = vmatpush1.msra.mxu0 0.0
        %512 = vmatprep.subr.mxu0 0.0
        %513 = vmatpush1.msra.mxu0 0.0
        %514 = vmatprep.subr.mxu0 0.0
        %515 = vmatpush1.msra.mxu0 0.0
        %516 = vmatprep.subr.mxu0 0.0
        %517 = vmatpush1.msra.mxu0 0.0
        %518 = vmatprep.subr.mxu0 0.0
        %519 = vmatpush1.msra.mxu0 0.0
        %520 = vmatprep.subr.mxu0 0.0
        %521 = vmatpush1.msra.mxu0 0.0
        %522 = vmatprep.subr.mxu0 0.0
        %523 = vmatpush1.msra.mxu0 0.0
        %524 = vmatprep.subr.mxu0 0.0
        %525 = vmatpush1.msra.mxu0 0.0
        %526 = vmatprep.subr.mxu0 0.0
        %527 = vmatpush1.msra.mxu0 0.0
        %528 = vmatprep.subr.mxu0 0.0
        %529 = vmatpush1.msra.mxu0 0.0
        %530 = vmatprep.subr.mxu0 0.0
        %531 = vmatpush1.msra.mxu0 0.0
        %532 = vmatprep.subr.mxu0 0.0
        %533 = vmatpush1.msra.mxu0 0.0
        %534 = vmatprep.subr.mxu0 0.0
        %535 = vmatpush1.msra.mxu0 0.0
        %536 = vmatprep.mubr.f32.mxu0 0.0
        %537 = vmatmul.mubr.f32.gmra.mrb[0].mxu0 %v466
        %v538 = vpop.f32.mrb[0].mxu0
        %v539 = vadd.f32 0.0, %v538
        %v540 = vpop.f32.mrb[0].mxu0
        %v541 = vadd.f32 0.0, %v540
        %542 = vdwg.mxu0
        %v543 = vlaneseq
        %v544 = vshrl.u32 %v543, 7
        %v545 = vsub.s32 0, %v544
        %v546 = vrot.slane %v539, %v545
        %v547 = vlaneseq
        %v548 = vshrl.u32 %v547, 7
        %v549 = vsub.s32 0, %v548
        %v550 = vrot.slane %v541, %v549
        %v553 = vcombine.low %v546, %v550
        %555 = vst [vmem:[%s259] sm:$0xff] %v553
        %s556 = sand.u32 %s166, 1
        %s557 = scalar_lea.sflag [#allocation5], %s556
        %s558 = sand.u32 %s166, 1
        %s559 = smul.addr %s558, 8
        %s560 = scalar_lea.vmem [#allocation4], %s559
        // Predicated region
        $region45: #{tpu_custom_call.1} parent=43 // pred_check
          %p561 = pneg %p176
        $region46: #{tpu_custom_call.1} parent=43 // pred_check_branch
          %563 = sbr.rel (%p561) target = $region48
        $region47: #{tpu_custom_call.1} parent=43 // pred_region
          %s565 = ssub.s32 128, 128
          %566 = vsyncadd %s557, %s565
          %s567 = smul.addr %s22, 2
          %s568 = smul.addr %s567, 64
          %s569 = scalar_lea.hbm %s6, %s568
          %s571 = sshll.u32 %s560, 4
          %s572 = int_to_ptr.vmem [resolvable:$true] %s571
          %574 = dma.vmem_to_hbm [thread:$0]  %s572, 128, %s569, %s557
        $region48: #{tpu_custom_call.1} parent=43 // pred_fallthru
          _
      $region44: #{tpu_custom_call.1} parent=5 // pred_fallthru
        _
      %p575 = scmp.le.s32.totalorder 2, %s17
      // Predicated region
      $region49: #{tpu_custom_call.1} parent=5 // pred_check
        %p576 = pneg %p575
      $region50: #{tpu_custom_call.1} parent=5 // pred_check_branch
        %578 = sbr.rel (%p576) target = $region52
      $region51: #{tpu_custom_call.1} parent=5 // pred_region
        %s579 = ssub.s32 %s17, 2
        // Predicated region
        $region53: #{tpu_custom_call.1} parent=51 // pred_check
          %p580 = pneg %p182
        $region54: #{tpu_custom_call.1} parent=51 // pred_check_branch
          %582 = sbr.rel (%p580) target = $region56
        $region55: #{tpu_custom_call.1} parent=51 // pred_region
          %s583 = sand.u32 %s167, 1
          %s584 = scalar_lea.sflag [#allocation5], %s583
          %s585 = sand.u32 %s167, 1
          %s586 = smul.addr %s585, 8
          %s587 = scalar_lea.vmem [#allocation4], %s586
          %588 = dma.done %s584, 128
        $region56: #{tpu_custom_call.1} parent=51 // pred_fallthru
          _
      $region52: #{tpu_custom_call.1} parent=5 // pred_fallthru
        _
    $region6: #{tpu_custom_call.1} parent=1 // loop_footer
      %s21 = sadd.s32 1, %s17
    $region7: #{tpu_custom_call.1} parent=1 // loop_footer_branch
      %16 = sbr.rel target = $region3
    $region8: #{tpu_custom_call.1} parent=1 // loop_exit
      _
    %589 = vsyncpa [#allocation5], 1
    %s590 = scalar_lea.sflag [#allocation5], 1
    %591 = vsyncpa %s590, 1

</llo_original>
